<compile_context>
chip_gen: v5e
topology: v5e:2x2
jax: 0.10.0
libtpu: 0.0.40
codegen_flags: <defaults>
</compile_context>

<pallas_src>
import jax
import jax.numpy as jnp
from jax.experimental import pallas as pl
from jax.experimental.pallas import tpu as pltpu

LANE = 128   # padded feature width (lane-dense); all layer dims must be <= LANE
SUB = 16     # sublane granularity valid for both bf16 (16) and f32 (8) blocks


def mlp_kernel(x_ref, w_ref, b_ref, o_ref):
    # x_ref: (TB, LANE)      bf16   streamed batch tile
    # w_ref: (4, LANE, LANE) bf16   resident packed weights
    # b_ref: (4, 1, LANE)    f32    resident biases
    # o_ref: (TB, LANE)      bf16   lane-dense padded output
    h = x_ref[...]
    for k in range(3):
        acc = jnp.dot(h, w_ref[k], preferred_element_type=jnp.float32) + b_ref[k]
        h = jnp.maximum(acc, 0.0).astype(jnp.bfloat16)   # ReLU on f32 acc, bf16 MXU input
    acc = jnp.dot(h, w_ref[3], preferred_element_type=jnp.float32) + b_ref[3]
    o_ref[...] = acc.astype(o_ref.dtype)


def _round_up(n, m):
    return ((n + m - 1) // m) * m


def pack_params(params, lane=LANE):
    """Pack [(w, b)] * 4 into a bf16 (4,lane,lane) weight slab + f32 (4,1,lane) bias slab.

    w: (in_k, out_k), b: (out_k,).  Zero padding is inert: padded input lanes
    multiply zero weight rows, padded output lanes get zero weight + zero bias.
    """
    n = len(params)
    w_slab = jnp.zeros((n, lane, lane), jnp.bfloat16)
    b_slab = jnp.zeros((n, 1, lane), jnp.float32)
    for k, (w, b) in enumerate(params):
        in_k, out_k = w.shape
        assert in_k <= lane and out_k <= lane, "layer dims must fit in 128 lanes"
        w_slab = w_slab.at[k, :in_k, :out_k].set(w.astype(jnp.bfloat16))
        b_slab = b_slab.at[k, 0, :out_k].set(jnp.reshape(b, (-1,)).astype(jnp.float32))
    return w_slab, b_slab


def mlp_forward(x, w_slab, b_slab, output_size, tile_b=1024):
    """x: (B, seq_len, feature_size) -> (B, output_size), f32."""
    B = x.shape[0]
    x2d = x.reshape(B, -1)                      # == torch reshape(B, -1)
    in_dim = x2d.shape[1]
    lane = w_slab.shape[-1]
    assert in_dim <= lane, "flattened input must fit in one 128-lane group"

    # Batch tiling: multiples of SUB sublanes, large tiles (cap ~tile_b) to
    # amortize per-step overhead, and >= 2 grid steps whenever the batch allows
    # so the "parallel" grid axis can feed both v7x TensorCores.
    b_rows = _round_up(B, SUB)
    n_steps = max(1, pl.cdiv(b_rows, tile_b))
    if n_steps == 1 and b_rows >= 2 * SUB:
        n_steps = 2
    tb = _round_up(pl.cdiv(b_rows, n_steps), SUB)
    b_pad = n_steps * tb

    # Single cheap pad in bf16 (halves the padded copy and the kernel's read
    # stream).  Padded batch rows compute bias-only garbage and are sliced off.
    xp = jnp.pad(x2d.astype(jnp.bfloat16),
                 ((0, b_pad - B), (0, lane - in_dim)))

    out_padded = pl.pallas_call(
        mlp_kernel,
        out_shape=jax.ShapeDtypeStruct((b_pad, lane), jnp.bfloat16),
        grid_spec=pltpu.PrefetchScalarGridSpec(
            num_scalar_prefetch=0,
            grid=(n_steps,),
            in_specs=[
                # Streamed x tile.  If profiling shows the x DMA still exposed
                # at large B, bump with pipeline_mode=pl.Buffered(3).
                pl.BlockSpec((tb, lane), lambda i: (i, 0)),
                pl.BlockSpec(w_slab.shape, lambda i: (0, 0, 0)),   # resident weights
                pl.BlockSpec(b_slab.shape, lambda i: (0, 0, 0)),   # resident biases
            ],
            out_specs=pl.BlockSpec((tb, lane), lambda i: (i, 0)),
        ),
        compiler_params=pltpu.CompilerParams(
            dimension_semantics=("parallel",)),   # shard batch across TCs (v7x)
    )(xp, w_slab, b_slab)

    return out_padded[:B, :output_size].astype(jnp.float32)


def init_params(key, in_features, hidden_size, output_size):
    """Deterministic init; weights stored (in, out), biases (out,)."""
    dims = [in_features, hidden_size[0], hidden_size[1], hidden_size[2], output_size]
    params = []
    for i in range(4):
        key, kw, kb = jax.random.split(key, 3)
        bound = 1.0 / jnp.sqrt(dims[i])
        w = jax.random.uniform(kw, (dims[i], dims[i + 1]), jnp.float32, -bound, bound)
        b = jax.random.uniform(kb, (dims[i + 1],), jnp.float32, -bound, bound)
        params.append((w, b))
    return params


if __name__ == "__main__":
    # Small shapes consistent with the module's forward: x is (batch, seq_len, feature_size).
    batch = 2
    feature_size = 4
    seq_len = 8
    hidden_size = (32, 64, 32)
    output_size = 16

    key = jax.random.PRNGKey(0)
    key, kx = jax.random.split(key)
    x = jax.random.normal(kx, (batch, seq_len, feature_size), jnp.float32)

    params = init_params(key, feature_size * seq_len, hidden_size, output_size)
    w_slab, b_slab = pack_params(params)          # one-time packing, outside hot path

    out = mlp_forward(x, w_slab, b_slab, output_size)
    jax.block_until_ready(out)

    # Pure-JAX f32 reference.  Kernel uses bf16 operands with f32 accumulation,
    # so compare with a bf16-appropriate tolerance.
    ref = x.reshape(batch, -1)
    for i, (w, b) in enumerate(params):
        ref = ref @ w + b
        if i < 3:
            ref = jnp.maximum(ref, 0.0)

    assert out.shape == (batch, output_size)
    max_err = jnp.max(jnp.abs(out - ref))
    assert jnp.allclose(out, ref, atol=1e-1, rtol=5e-2), f"max abs err {max_err}"

    print("KERNEL_OK")
</pallas_src>

<mosaic_0001>
module attributes {stable_mosaic.version = 11 : i64} {
  func.func @mlp_kernel(%arg0: i32, %arg1: memref<16x128xbf16, #tpu.memory_space<vmem>>, %arg2: memref<4x128x128xbf16, #tpu.memory_space<vmem>>, %arg3: memref<4x1x128xf32, #tpu.memory_space<vmem>>, %arg4: memref<16x128xbf16, #tpu.memory_space<vmem>>) attributes {dimension_semantics = [#tpu.dimension_semantics<parallel>], iteration_bounds = array<i64: 1>, scalar_prefetch = 0 : i64, scratch_operands = 0 : i64, tpu.core_type = #tpu.core_type<tc>, window_params = [{transform_indices = @transform_0, window_bounds = array<i64: 16, 128>}, {pipeline_mode = #tpu.pipeline_mode<synchronous>, transform_indices = @transform_1, window_bounds = array<i64: 4, 128, 128>}, {pipeline_mode = #tpu.pipeline_mode<synchronous>, transform_indices = @transform_2, window_bounds = array<i64: 4, 1, 128>}, {transform_indices = @transform_3, window_bounds = array<i64: 16, 128>}]} {
    %c0 = arith.constant 0 : index
    %c0_0 = arith.constant 0 : index
    %0 = vector.load %arg1[%c0, %c0_0] : memref<16x128xbf16, #tpu.memory_space<vmem>>, vector<16x128xbf16>
    %c0_1 = arith.constant 0 : index
    %c0_2 = arith.constant 0 : index
    %c0_3 = arith.constant 0 : index
    %1 = vector.load %arg2[%c0_1, %c0_2, %c0_3] : memref<4x128x128xbf16, #tpu.memory_space<vmem>>, vector<1x128x128xbf16>
    %2 = vector.shape_cast %1 : vector<1x128x128xbf16> to vector<128x128xbf16>
    %cst = arith.constant dense<0.000000e+00> : vector<16x128xf32>
    %3 = tpu.matmul %0, %2, %cst {dimension_numbers = #tpu.dot_dimension_numbers<[1], [0], [0], [1], [0, 0, 1, 1], [], []>} : vector<16x128xbf16>, vector<128x128xbf16>, vector<16x128xf32> -> vector<16x128xf32>
    %c0_4 = arith.constant 0 : index
    %c0_5 = arith.constant 0 : index
    %c0_6 = arith.constant 0 : index
    %4 = vector.load %arg3[%c0_4, %c0_5, %c0_6] : memref<4x1x128xf32, #tpu.memory_space<vmem>>, vector<1x1x128xf32>
    %5 = vector.shape_cast %4 : vector<1x1x128xf32> to vector<1x128xf32>
    %6 = vector.broadcast %5 : vector<1x128xf32> to vector<16x128xf32>
    %7 = arith.addf %3, %6 : vector<16x128xf32>
    %cst_7 = arith.constant 0.000000e+00 : f32
    %8 = vector.broadcast %cst_7 : f32 to vector<16x128xf32>
    %9 = arith.maximumf %7, %8 : vector<16x128xf32>
    %10 = arith.truncf %9 : vector<16x128xf32> to vector<16x128xbf16>
    %c1 = arith.constant 1 : index
    %c0_8 = arith.constant 0 : index
    %c0_9 = arith.constant 0 : index
    %11 = vector.load %arg2[%c1, %c0_8, %c0_9] : memref<4x128x128xbf16, #tpu.memory_space<vmem>>, vector<1x128x128xbf16>
    %12 = vector.shape_cast %11 : vector<1x128x128xbf16> to vector<128x128xbf16>
    %cst_10 = arith.constant dense<0.000000e+00> : vector<16x128xf32>
    %13 = tpu.matmul %10, %12, %cst_10 {dimension_numbers = #tpu.dot_dimension_numbers<[1], [0], [0], [1], [0, 0, 1, 1], [], []>} : vector<16x128xbf16>, vector<128x128xbf16>, vector<16x128xf32> -> vector<16x128xf32>
    %c1_11 = arith.constant 1 : index
    %c0_12 = arith.constant 0 : index
    %c0_13 = arith.constant 0 : index
    %14 = vector.load %arg3[%c1_11, %c0_12, %c0_13] : memref<4x1x128xf32, #tpu.memory_space<vmem>>, vector<1x1x128xf32>
    %15 = vector.shape_cast %14 : vector<1x1x128xf32> to vector<1x128xf32>
    %16 = vector.broadcast %15 : vector<1x128xf32> to vector<16x128xf32>
    %17 = arith.addf %13, %16 : vector<16x128xf32>
    %cst_14 = arith.constant 0.000000e+00 : f32
    %18 = vector.broadcast %cst_14 : f32 to vector<16x128xf32>
    %19 = arith.maximumf %17, %18 : vector<16x128xf32>
    %20 = arith.truncf %19 : vector<16x128xf32> to vector<16x128xbf16>
    %c2 = arith.constant 2 : index
    %c0_15 = arith.constant 0 : index
    %c0_16 = arith.constant 0 : index
    %21 = vector.load %arg2[%c2, %c0_15, %c0_16] : memref<4x128x128xbf16, #tpu.memory_space<vmem>>, vector<1x128x128xbf16>
    %22 = vector.shape_cast %21 : vector<1x128x128xbf16> to vector<128x128xbf16>
    %cst_17 = arith.constant dense<0.000000e+00> : vector<16x128xf32>
    %23 = tpu.matmul %20, %22, %cst_17 {dimension_numbers = #tpu.dot_dimension_numbers<[1], [0], [0], [1], [0, 0, 1, 1], [], []>} : vector<16x128xbf16>, vector<128x128xbf16>, vector<16x128xf32> -> vector<16x128xf32>
    %c2_18 = arith.constant 2 : index
    %c0_19 = arith.constant 0 : index
    %c0_20 = arith.constant 0 : index
    %24 = vector.load %arg3[%c2_18, %c0_19, %c0_20] : memref<4x1x128xf32, #tpu.memory_space<vmem>>, vector<1x1x128xf32>
    %25 = vector.shape_cast %24 : vector<1x1x128xf32> to vector<1x128xf32>
    %26 = vector.broadcast %25 : vector<1x128xf32> to vector<16x128xf32>
    %27 = arith.addf %23, %26 : vector<16x128xf32>
    %cst_21 = arith.constant 0.000000e+00 : f32
    %28 = vector.broadcast %cst_21 : f32 to vector<16x128xf32>
    %29 = arith.maximumf %27, %28 : vector<16x128xf32>
    %30 = arith.truncf %29 : vector<16x128xf32> to vector<16x128xbf16>
    %c3 = arith.constant 3 : index
    %c0_22 = arith.constant 0 : index
    %c0_23 = arith.constant 0 : index
    %31 = vector.load %arg2[%c3, %c0_22, %c0_23] : memref<4x128x128xbf16, #tpu.memory_space<vmem>>, vector<1x128x128xbf16>
    %32 = vector.shape_cast %31 : vector<1x128x128xbf16> to vector<128x128xbf16>
    %cst_24 = arith.constant dense<0.000000e+00> : vector<16x128xf32>
    %33 = tpu.matmul %30, %32, %cst_24 {dimension_numbers = #tpu.dot_dimension_numbers<[1], [0], [0], [1], [0, 0, 1, 1], [], []>} : vector<16x128xbf16>, vector<128x128xbf16>, vector<16x128xf32> -> vector<16x128xf32>
    %c3_25 = arith.constant 3 : index
    %c0_26 = arith.constant 0 : index
    %c0_27 = arith.constant 0 : index
    %34 = vector.load %arg3[%c3_25, %c0_26, %c0_27] : memref<4x1x128xf32, #tpu.memory_space<vmem>>, vector<1x1x128xf32>
    %35 = vector.shape_cast %34 : vector<1x1x128xf32> to vector<1x128xf32>
    %36 = vector.broadcast %35 : vector<1x128xf32> to vector<16x128xf32>
    %37 = arith.addf %33, %36 : vector<16x128xf32>
    %38 = arith.truncf %37 : vector<16x128xf32> to vector<16x128xbf16>
    %c0_28 = arith.constant 0 : index
    %c0_29 = arith.constant 0 : index
    %39 = vector.load %arg4[%c0_28, %c0_29] : memref<16x128xbf16, #tpu.memory_space<vmem>>, vector<16x128xbf16>
    tpu.vector_store %arg4[%c0_28, %c0_29], %38 {strides = array<i32>} : memref<16x128xbf16, #tpu.memory_space<vmem>>, vector<16x128xbf16>,
    return
  }
  func.func @transform_0(%arg0: i32) -> (i32, i32) {
    %c0_i32 = arith.constant 0 : i32
    %c0_i32_0 = arith.constant 0 : i32
    return %arg0, %c0_i32 : i32, i32
  }
  func.func @transform_1(%arg0: i32) -> (i32, i32, i32) {
    %c0_i32 = arith.constant 0 : i32
    %c0_i32_0 = arith.constant 0 : i32
    %c0_i32_1 = arith.constant 0 : i32
    %c0_i32_2 = arith.constant 0 : i32
    return %c0_i32, %c0_i32_0, %c0_i32_1 : i32, i32, i32
  }
  func.func @transform_2(%arg0: i32) -> (i32, i32, i32) {
    %c0_i32 = arith.constant 0 : i32
    %c0_i32_0 = arith.constant 0 : i32
    %c0_i32_1 = arith.constant 0 : i32
    %c0_i32_2 = arith.constant 0 : i32
    return %c0_i32, %c0_i32_0, %c0_i32_1 : i32, i32, i32
  }
  func.func @transform_3(%arg0: i32) -> (i32, i32) {
    %c0_i32 = arith.constant 0 : i32
    %c0_i32_0 = arith.constant 0 : i32
    return %arg0, %c0_i32 : i32, i32
  }
}

</mosaic_0001>

<llo_original>
// kernel: tpu_custom_call.1
$region0: #{tpu_custom_call.1}
  #allocation0 [shape = 'u32[]', space=smem, size = 0x4, offset = 0x4, fixed_abs, tag = 'smem constant byte address 0x4 - core index']
  #allocation1 [shape = 'u32[72,128]{1,0:T(1,128)}', space=vmem, size = 0x9000, scoped, tag = 'internal scratch']
  %s0 = inlined_call_operand.hbm [shape: bf16[16,128], index: 0, kind: input, shape index: {}]
  %s1 = inlined_call_operand.hbm [shape: bf16[4,128,128], index: 1, kind: input, shape index: {}]
  %s2 = inlined_call_operand.hbm [shape: f32[4,1,128], index: 2, kind: input, shape index: {}]
  %s3 = inlined_call_operand.hbm [shape: bf16[16,128], index: 3, kind: output, shape index: {}]
  %s4 = sld [smem:[#allocation0]]
  $region34: #{tpu_custom_call.1} parent=0
    _
  %s6 = ssub.s32 1, %s4
  %s7 = scalar_select 0, %s6, %s4
  $region1: #{tpu_custom_call.1} parent=0
    #allocation2 [shape = 'u8[4096]{0}', space=vmem, size = 0x1000, scoped, tag = 'input window, operand 0, single buffered']
    #allocation3 [shape = 's32[1]{0}', space=sflag, size = 0x4, scoped, tag = 'scoped memory for tpu_custom_call.1']
    #allocation4 [shape = 's32[1]{0}', space=sflag, size = 0x4, scoped, tag = 'scoped memory for tpu_custom_call.1']
    #allocation5 [shape = 'u8[131072]{0}', space=vmem, size = 0x20000, scoped, tag = 'input window, operand 1, single buffered']
    #allocation6 [shape = 's32[1]{0}', space=sflag, size = 0x4, scoped, tag = 'scoped memory for tpu_custom_call.1']
    #allocation7 [shape = 'u8[2048]{0}', space=vmem, size = 0x800, scoped, tag = 'input window, operand 2, single buffered']
    #allocation8 [shape = 'u8[4096]{0}', space=vmem, size = 0x1000, scoped, tag = 'output window, operand 0, single buffered']
    %8 = vsyncpa [#allocation3], 0
    %9 = vsyncpa [#allocation6], 0
    %10 = vsyncpa [#allocation4], 0
    // Predicated region
    $region2: #{tpu_custom_call.1} parent=1 // pred_check
      _
    $region3: #{tpu_custom_call.1} parent=1 // pred_check_branch
      %12 = sbr.rel (0) target = $region5
    $region4: #{tpu_custom_call.1} parent=1 // pred_region
      %14 = vsyncadd [#allocation3], 0
      %s15 = sshll.u32 %s0, 4
      %s16 = int_to_ptr.hbm [resolvable:$true] %s15
      %s17 = sshll.u32 [#allocation2], 4
      %s18 = int_to_ptr.vmem [resolvable:$true] %s17
      %23 = dma.hbm_to_vmem [thread:$0]  %s16, 128, %s18, [#allocation3], 64, 64, 4
    $region5: #{tpu_custom_call.1} parent=1 // pred_fallthru
      _
    // Predicated region
    $region6: #{tpu_custom_call.1} parent=1 // pred_check
      _
    $region7: #{tpu_custom_call.1} parent=1 // pred_check_branch
      %25 = sbr.rel (0) target = $region9
    $region8: #{tpu_custom_call.1} parent=1 // pred_region
      %27 = vsyncadd [#allocation6], 0
      %s28 = sshll.u32 %s1, 4
      %s29 = int_to_ptr.hbm [resolvable:$true] %s28
      %s30 = sshll.u32 [#allocation5], 4
      %s31 = int_to_ptr.vmem [resolvable:$true] %s30
      %36 = dma.hbm_to_vmem [thread:$0]  %s29, 4096, %s31, [#allocation6], 64, 64, 4
    $region9: #{tpu_custom_call.1} parent=1 // pred_fallthru
      _
    // Predicated region
    $region10: #{tpu_custom_call.1} parent=1 // pred_check
      _
    $region11: #{tpu_custom_call.1} parent=1 // pred_check_branch
      %38 = sbr.rel (0) target = $region13
    $region12: #{tpu_custom_call.1} parent=1 // pred_region
      %40 = vsyncadd [#allocation6], 0
      %s41 = sshll.u32 %s2, 4
      %s42 = int_to_ptr.hbm [resolvable:$true] %s41
      %s43 = sshll.u32 [#allocation7], 4
      %s44 = int_to_ptr.vmem [resolvable:$true] %s43
      %49 = dma.hbm_to_vmem [thread:$0]  %s42, 64, %s44, [#allocation6], 16, 16, 1
    $region13: #{tpu_custom_call.1} parent=1 // pred_fallthru
      _
    // Predicated region
    $region14: #{tpu_custom_call.1} parent=1 // pred_check
      _
    $region15: #{tpu_custom_call.1} parent=1 // pred_check_branch
      %51 = sbr.rel (0) target = $region17
    $region16: #{tpu_custom_call.1} parent=1 // pred_region
      %53 = dma.done [#allocation3], 128
    $region17: #{tpu_custom_call.1} parent=1 // pred_fallthru
      _
    // Predicated region
    $region18: #{tpu_custom_call.1} parent=1 // pred_check
      _
    $region19: #{tpu_custom_call.1} parent=1 // pred_check_branch
      %55 = sbr.rel (0) target = $region21
    $region20: #{tpu_custom_call.1} parent=1 // pred_region
      %57 = dma.done [#allocation6], 4096
    $region21: #{tpu_custom_call.1} parent=1 // pred_fallthru
      _
    // Predicated region
    $region22: #{tpu_custom_call.1} parent=1 // pred_check
      _
    $region23: #{tpu_custom_call.1} parent=1 // pred_check_branch
      %59 = sbr.rel (0) target = $region25
    $region24: #{tpu_custom_call.1} parent=1 // pred_region
      %61 = dma.done [#allocation6], 64
    $region25: #{tpu_custom_call.1} parent=1 // pred_fallthru
      _
    %v62 = vld [vmem:[#allocation2] sm:$0xf]
    %v63 = vld [vmem:[#allocation2 + $0x4] sm:$0xf]
    %v64 = vld [vmem:[#allocation5] sm:$0xf]
    %v65 = vld [vmem:[#allocation5 + $0x4] sm:$0xf]
    %v66 = vld [vmem:[#allocation5 + $0x8] sm:$0xf]
    %v67 = vld [vmem:[#allocation5 + $0xc] sm:$0xf]
    %v68 = vld [vmem:[#allocation5 + $0x10] sm:$0xf]
    %v69 = vld [vmem:[#allocation5 + $0x14] sm:$0xf]
    %v70 = vld [vmem:[#allocation5 + $0x18] sm:$0xf]
    %v71 = vld [vmem:[#allocation5 + $0x1c] sm:$0xf]
    %v72 = vld [vmem:[#allocation5 + $0x20] sm:$0xf]
    %v73 = vld [vmem:[#allocation5 + $0x24] sm:$0xf]
    %v74 = vld [vmem:[#allocation5 + $0x28] sm:$0xf]
    %v75 = vld [vmem:[#allocation5 + $0x2c] sm:$0xf]
    %v76 = vld [vmem:[#allocation5 + $0x30] sm:$0xf]
    %v77 = vld [vmem:[#allocation5 + $0x34] sm:$0xf]
    %v78 = vld [vmem:[#allocation5 + $0x38] sm:$0xf]
    %v79 = vld [vmem:[#allocation5 + $0x3c] sm:$0xf]
    %v80 = vld [vmem:[#allocation7] sm:$0x1]
    %v82 = vperm.slane %v80, 0
    %v86 = vunpack.c.l.b16 %v62
    %v87 = vunpack.c.l.b16 %v63
    %v88 = vpack.c.b16 %v87, %v86
    %v106 = vunpack.c.l.b16 %v64
    %v107 = vunpack.c.l.b16 %v65
    %v108 = vunpack.c.l.b16 %v66
    %v109 = vunpack.c.l.b16 %v67
    %v110 = vunpack.c.l.b16 %v68
    %v111 = vunpack.c.l.b16 %v69
    %v112 = vunpack.c.l.b16 %v70
    %v113 = vunpack.c.l.b16 %v71
    %v114 = vunpack.c.l.b16 %v72
    %v115 = vunpack.c.l.b16 %v73
    %v116 = vunpack.c.l.b16 %v74
    %v117 = vunpack.c.l.b16 %v75
    %v118 = vunpack.c.l.b16 %v76
    %v119 = vunpack.c.l.b16 %v77
    %v120 = vunpack.c.l.b16 %v78
    %v121 = vunpack.c.l.b16 %v79
    %v122 = vpack.c.b16 %v107, %v106
    %v123 = vpack.c.b16 %v109, %v108
    %v124 = vpack.c.b16 %v111, %v110
    %v125 = vpack.c.b16 %v113, %v112
    %v126 = vpack.c.b16 %v115, %v114
    %v127 = vpack.c.b16 %v117, %v116
    %v128 = vpack.c.b16 %v119, %v118
    %v129 = vpack.c.b16 %v121, %v120
    %138 = vmatpush.bf16.msra.mxu0 %v129
    %139 = vmatpush.bf16.msra.mxu0 %v128
    %140 = vmatpush.bf16.msra.mxu0 %v127
    %141 = vmatpush.bf16.msra.mxu0 %v126
    %142 = vmatpush.bf16.msra.mxu0 %v125
    %143 = vmatpush.bf16.msra.mxu0 %v124
    %144 = vmatpush.bf16.msra.mxu0 %v123
    %145 = vmatpush.bf16.msra.mxu0 %v122
    %146 = vmatmul.bf16.gmra.mxu0 %v88
    %v147 = vpop.f32.mrf.mxu0
    %v148 = vadd.f32 %v82, %v147
    %v149 = vpop.f32.mrf.mxu0
    %v150 = vadd.f32 %v82, %v149
    %151 = vdwg.mxu0
    %v152 = vmax.f32 %v148, 0.0
    %v153 = vmax.f32 %v150, 0.0
    %v154 = vpack.c.bf16 %v153, %v152
    %s155 = scalar_lea.vmem [#allocation5], 64
    %v156 = vld [vmem:[%s155] sm:$0xf]
    %v157 = vld [vmem:[%s155 + $0x4] sm:$0xf]
    %v158 = vld [vmem:[%s155 + $0x8] sm:$0xf]
    %v159 = vld [vmem:[%s155 + $0xc] sm:$0xf]
    %v160 = vld [vmem:[%s155 + $0x10] sm:$0xf]
    %v161 = vld [vmem:[%s155 + $0x14] sm:$0xf]
    %v162 = vld [vmem:[%s155 + $0x18] sm:$0xf]
    %v163 = vld [vmem:[%s155 + $0x1c] sm:$0xf]
    %v164 = vld [vmem:[%s155 + $0x20] sm:$0xf]
    %v165 = vld [vmem:[%s155 + $0x24] sm:$0xf]
    %v166 = vld [vmem:[%s155 + $0x28] sm:$0xf]
    %v167 = vld [vmem:[%s155 + $0x2c] sm:$0xf]
    %v168 = vld [vmem:[%s155 + $0x30] sm:$0xf]
    %v169 = vld [vmem:[%s155 + $0x34] sm:$0xf]
    %v170 = vld [vmem:[%s155 + $0x38] sm:$0xf]
    %v171 = vld [vmem:[%s155 + $0x3c] sm:$0xf]
    %s172 = scalar_lea.vmem [#allocation7], 1
    %v173 = vld [vmem:[%s172] sm:$0x1]
    %v175 = vperm.slane %v173, 0
    %v193 = vunpack.c.l.b16 %v156
    %v194 = vunpack.c.l.b16 %v157
    %v195 = vunpack.c.l.b16 %v158
    %v196 = vunpack.c.l.b16 %v159
    %v197 = vunpack.c.l.b16 %v160
    %v198 = vunpack.c.l.b16 %v161
    %v199 = vunpack.c.l.b16 %v162
    %v200 = vunpack.c.l.b16 %v163
    %v201 = vunpack.c.l.b16 %v164
    %v202 = vunpack.c.l.b16 %v165
    %v203 = vunpack.c.l.b16 %v166
    %v204 = vunpack.c.l.b16 %v167
    %v205 = vunpack.c.l.b16 %v168
    %v206 = vunpack.c.l.b16 %v169
    %v207 = vunpack.c.l.b16 %v170
    %v208 = vunpack.c.l.b16 %v171
    %v209 = vpack.c.b16 %v194, %v193
    %v210 = vpack.c.b16 %v196, %v195
    %v211 = vpack.c.b16 %v198, %v197
    %v212 = vpack.c.b16 %v200, %v199
    %v213 = vpack.c.b16 %v202, %v201
    %v214 = vpack.c.b16 %v204, %v203
    %v215 = vpack.c.b16 %v206, %v205
    %v216 = vpack.c.b16 %v208, %v207
    %225 = vmatpush.bf16.msra.mxu0 %v216
    %226 = vmatpush.bf16.msra.mxu0 %v215
    %227 = vmatpush.bf16.msra.mxu0 %v214
    %228 = vmatpush.bf16.msra.mxu0 %v213
    %229 = vmatpush.bf16.msra.mxu0 %v212
    %230 = vmatpush.bf16.msra.mxu0 %v211
    %231 = vmatpush.bf16.msra.mxu0 %v210
    %232 = vmatpush.bf16.msra.mxu0 %v209
    %233 = vmatmul.bf16.gmra.mxu0 %v154
    %v234 = vpop.f32.mrf.mxu0
    %v235 = vadd.f32 %v175, %v234
    %v236 = vpop.f32.mrf.mxu0
    %v237 = vadd.f32 %v175, %v236
    %238 = vdwg.mxu0
    %v239 = vmax.f32 %v235, 0.0
    %v240 = vmax.f32 %v237, 0.0
    %v241 = vpack.c.bf16 %v240, %v239
    %s242 = scalar_lea.vmem [#allocation5], 128
    %v243 = vld [vmem:[%s242] sm:$0xf]
    %v244 = vld [vmem:[%s242 + $0x4] sm:$0xf]
    %v245 = vld [vmem:[%s242 + $0x8] sm:$0xf]
    %v246 = vld [vmem:[%s242 + $0xc] sm:$0xf]
    %v247 = vld [vmem:[%s242 + $0x10] sm:$0xf]
    %v248 = vld [vmem:[%s242 + $0x14] sm:$0xf]
    %v249 = vld [vmem:[%s242 + $0x18] sm:$0xf]
    %v250 = vld [vmem:[%s242 + $0x1c] sm:$0xf]
    %v251 = vld [vmem:[%s242 + $0x20] sm:$0xf]
    %v252 = vld [vmem:[%s242 + $0x24] sm:$0xf]
    %v253 = vld [vmem:[%s242 + $0x28] sm:$0xf]
    %v254 = vld [vmem:[%s242 + $0x2c] sm:$0xf]
    %v255 = vld [vmem:[%s242 + $0x30] sm:$0xf]
    %v256 = vld [vmem:[%s242 + $0x34] sm:$0xf]
    %v257 = vld [vmem:[%s242 + $0x38] sm:$0xf]
    %v258 = vld [vmem:[%s242 + $0x3c] sm:$0xf]
    %s259 = scalar_lea.vmem [#allocation7], 2
    %v260 = vld [vmem:[%s259] sm:$0x1]
    %v262 = vperm.slane %v260, 0
    %v280 = vunpack.c.l.b16 %v243
    %v281 = vunpack.c.l.b16 %v244
    %v282 = vunpack.c.l.b16 %v245
    %v283 = vunpack.c.l.b16 %v246
    %v284 = vunpack.c.l.b16 %v247
    %v285 = vunpack.c.l.b16 %v248
    %v286 = vunpack.c.l.b16 %v249
    %v287 = vunpack.c.l.b16 %v250
    %v288 = vunpack.c.l.b16 %v251
    %v289 = vunpack.c.l.b16 %v252
    %v290 = vunpack.c.l.b16 %v253
    %v291 = vunpack.c.l.b16 %v254
    %v292 = vunpack.c.l.b16 %v255
    %v293 = vunpack.c.l.b16 %v256
    %v294 = vunpack.c.l.b16 %v257
    %v295 = vunpack.c.l.b16 %v258
    %v296 = vpack.c.b16 %v281, %v280
    %v297 = vpack.c.b16 %v283, %v282
    %v298 = vpack.c.b16 %v285, %v284
    %v299 = vpack.c.b16 %v287, %v286
    %v300 = vpack.c.b16 %v289, %v288
    %v301 = vpack.c.b16 %v291, %v290
    %v302 = vpack.c.b16 %v293, %v292
    %v303 = vpack.c.b16 %v295, %v294
    %312 = vmatpush.bf16.msra.mxu0 %v303
    %313 = vmatpush.bf16.msra.mxu0 %v302
    %314 = vmatpush.bf16.msra.mxu0 %v301
    %315 = vmatpush.bf16.msra.mxu0 %v300
    %316 = vmatpush.bf16.msra.mxu0 %v299
    %317 = vmatpush.bf16.msra.mxu0 %v298
    %318 = vmatpush.bf16.msra.mxu0 %v297
    %319 = vmatpush.bf16.msra.mxu0 %v296
    %320 = vmatmul.bf16.gmra.mxu0 %v241
    %v321 = vpop.f32.mrf.mxu0
    %v322 = vadd.f32 %v262, %v321
    %v323 = vpop.f32.mrf.mxu0
    %v324 = vadd.f32 %v262, %v323
    %325 = vdwg.mxu0
    %v326 = vmax.f32 %v322, 0.0
    %v327 = vmax.f32 %v324, 0.0
    %v328 = vpack.c.bf16 %v327, %v326
    %s329 = scalar_lea.vmem [#allocation5], 192
    %v330 = vld [vmem:[%s329] sm:$0xf]
    %v331 = vld [vmem:[%s329 + $0x4] sm:$0xf]
    %v332 = vld [vmem:[%s329 + $0x8] sm:$0xf]
    %v333 = vld [vmem:[%s329 + $0xc] sm:$0xf]
    %v334 = vld [vmem:[%s329 + $0x10] sm:$0xf]
    %v335 = vld [vmem:[%s329 + $0x14] sm:$0xf]
    %v336 = vld [vmem:[%s329 + $0x18] sm:$0xf]
    %v337 = vld [vmem:[%s329 + $0x1c] sm:$0xf]
    %v338 = vld [vmem:[%s329 + $0x20] sm:$0xf]
    %v339 = vld [vmem:[%s329 + $0x24] sm:$0xf]
    %v340 = vld [vmem:[%s329 + $0x28] sm:$0xf]
    %v341 = vld [vmem:[%s329 + $0x2c] sm:$0xf]
    %v342 = vld [vmem:[%s329 + $0x30] sm:$0xf]
    %v343 = vld [vmem:[%s329 + $0x34] sm:$0xf]
    %v344 = vld [vmem:[%s329 + $0x38] sm:$0xf]
    %v345 = vld [vmem:[%s329 + $0x3c] sm:$0xf]
    %s346 = scalar_lea.vmem [#allocation7], 3
    %v347 = vld [vmem:[%s346] sm:$0x1]
    %v349 = vperm.slane %v347, 0
    %v367 = vunpack.c.l.b16 %v330
    %v368 = vunpack.c.l.b16 %v331
    %v369 = vunpack.c.l.b16 %v332
    %v370 = vunpack.c.l.b16 %v333
    %v371 = vunpack.c.l.b16 %v334
    %v372 = vunpack.c.l.b16 %v335
    %v373 = vunpack.c.l.b16 %v336
    %v374 = vunpack.c.l.b16 %v337
    %v375 = vunpack.c.l.b16 %v338
    %v376 = vunpack.c.l.b16 %v339
    %v377 = vunpack.c.l.b16 %v340
    %v378 = vunpack.c.l.b16 %v341
    %v379 = vunpack.c.l.b16 %v342
    %v380 = vunpack.c.l.b16 %v343
    %v381 = vunpack.c.l.b16 %v344
    %v382 = vunpack.c.l.b16 %v345
    %v383 = vpack.c.b16 %v368, %v367
    %v384 = vpack.c.b16 %v370, %v369
    %v385 = vpack.c.b16 %v372, %v371
    %v386 = vpack.c.b16 %v374, %v373
    %v387 = vpack.c.b16 %v376, %v375
    %v388 = vpack.c.b16 %v378, %v377
    %v389 = vpack.c.b16 %v380, %v379
    %v390 = vpack.c.b16 %v382, %v381
    %399 = vmatpush.bf16.msra.mxu0 %v390
    %400 = vmatpush.bf16.msra.mxu0 %v389
    %401 = vmatpush.bf16.msra.mxu0 %v388
    %402 = vmatpush.bf16.msra.mxu0 %v387
    %403 = vmatpush.bf16.msra.mxu0 %v386
    %404 = vmatpush.bf16.msra.mxu0 %v385
    %405 = vmatpush.bf16.msra.mxu0 %v384
    %406 = vmatpush.bf16.msra.mxu0 %v383
    %407 = vmatmul.bf16.gmra.mxu0 %v328
    %v408 = vpop.f32.mrf.mxu0
    %v409 = vadd.f32 %v349, %v408
    %v410 = vpop.f32.mrf.mxu0
    %v411 = vadd.f32 %v349, %v410
    %412 = vdwg.mxu0
    %v413 = vpack.c.bf16 %v409, %v409
    %v414 = vpack.c.bf16 %v411, %v411
    %415 = vst [vmem:[#allocation8] sm:$0xf] %v413
    %416 = vst [vmem:[#allocation8 + $0x4] sm:$0xf] %v414
    // Predicated region
    $region26: #{tpu_custom_call.1} parent=1 // pred_check
      _
    $region27: #{tpu_custom_call.1} parent=1 // pred_check_branch
      %418 = sbr.rel (0) target = $region29
    $region28: #{tpu_custom_call.1} parent=1 // pred_region
      %420 = vsyncadd [#allocation4], 0
      %s421 = sshll.u32 [#allocation8], 4
      %s422 = int_to_ptr.vmem [resolvable:$true] %s421
      %s423 = sshll.u32 %s3, 4
      %s424 = int_to_ptr.hbm [resolvable:$true] %s423
      %429 = dma.vmem_to_hbm [thread:$0]  %s422, 128, %s424, [#allocation4], 64, 64, 4
    $region29: #{tpu_custom_call.1} parent=1 // pred_fallthru
      _
    // Predicated region
    $region30: #{tpu_custom_call.1} parent=1 // pred_check
      _
    $region31: #{tpu_custom_call.1} parent=1 // pred_check_branch
      %431 = sbr.rel (0) target = $region33
    $region32: #{tpu_custom_call.1} parent=1 // pred_region
      %433 = dma.done [#allocation4], 128
    $region33: #{tpu_custom_call.1} parent=1 // pred_fallthru
      _
    %434 = vsyncpa [#allocation3], 1
    %435 = vsyncpa [#allocation6], 1
    %436 = vsyncpa [#allocation4], 1

</llo_original>
